<compile_context>
chip_gen: v6e
topology: v6e:2x2x1
jax: 0.10.0
libtpu: 0.0.40
codegen_flags: <defaults>
</compile_context>

<pallas_src>
import functools

import jax
import jax.numpy as jnp
from jax.experimental import pallas as pl
from jax.experimental.pallas import tpu as pltpu

LMD_1 = -0.25
LMD_2 = -0.2

_INPUT_VMEM_BUDGET = 24 * 1024 * 1024   # bytes for the 6 double-buffered input tiles
_MAX_BLOCK_ROWS = 4096                   # amortize ~0.35us/step overhead (v7x HBM)
_REDUCE_CHUNK = 512                      # rows reduced per static chunk inside kernel


def _round_up(x, m):
    return (x + m - 1) // m * m


def _e2e_loss_kernel(q_ref,                              # (1,) quantile in SMEM
                     out_ref, tgt_ref,                   # pair 1
                     vo_ref, vt_ref,                     # pair 2
                     so_ref, st_ref,                     # pair 3
                     qp_ref, vp_ref, sp_ref,             # (1, 8, D) partial sums
                     *, tb, d, chunk, n_rows, need_mask):
    q = q_ref[0]
    # q*max(-diff,0) + (1-q)*max(diff,0) == max(-q*diff, (1-q)*diff)  for q in [0,1]
    nq = -q
    qm = 1.0 - q
    row0 = pl.program_id(0) * tb
    n_chunks = tb // chunk

    def pinball_chunk(pred_ref, targ_ref, lo, hi, valid):
        pred = pred_ref[lo:hi, :].astype(jnp.float32)
        targ = targ_ref[lo:hi, :].astype(jnp.float32)
        diff = pred - targ
        loss = jnp.maximum(nq * diff, qm * diff)
        if valid is not None:
            loss = jnp.where(valid, loss, 0.0)       # kills garbage OOB rows (NaN-safe)
        # Sublane-group partial sum: VPU adds only, lane-dense (8, d) result.
        return jnp.sum(loss.reshape(chunk // 8, 8, d), axis=0)

    qa = jnp.zeros((8, d), jnp.float32)
    va = jnp.zeros((8, d), jnp.float32)
    sa = jnp.zeros((8, d), jnp.float32)
    for c in range(n_chunks):                        # static trip count <= 8
        lo, hi = c * chunk, (c + 1) * chunk          # static slices: free ref views
        if need_mask:
            rows = jax.lax.broadcasted_iota(jnp.int32, (chunk, d), 0) + (row0 + lo)
            valid = rows < n_rows
        else:
            valid = None
        qa = qa + pinball_chunk(out_ref, tgt_ref, lo, hi, valid)
        va = va + pinball_chunk(vo_ref, vt_ref, lo, hi, valid)
        sa = sa + pinball_chunk(so_ref, st_ref, lo, hi, valid)

    qp_ref[...] = qa.reshape(1, 8, d)
    vp_ref[...] = va.reshape(1, 8, d)
    sp_ref[...] = sa.reshape(1, 8, d)


def e2e_v6_loss(vlt_o, vlt_t, sf_o, sf_t, out, target, quantile,
                lmd_1=LMD_1, lmd_2=LMD_2):
    if isinstance(quantile, (int, float)):
        assert 0.0 <= quantile <= 1.0, "pinball identity used requires quantile in [0, 1]"

    arrs = [jnp.asarray(a) for a in (out, target, vlt_o, vlt_t, sf_o, sf_t)]
    shape = arrs[0].shape
    for a in arrs:
        assert a.shape == shape, "all six inputs must share one shape"

    # Flatten to 2D — metadata-only reshape, no HBM copy.
    def as2d(x):
        if x.ndim == 0:
            return x.reshape(1, 1)
        if x.ndim == 1:
            return x.reshape(1, -1)
        return x.reshape(-1, x.shape[-1])

    arrs2d = [as2d(a) for a in arrs]
    N, D = arrs2d[0].shape
    Dv = _round_up(D, 128)                              # VMEM lane footprint per row

    # Sublane alignment of the row tile depends on dtype packing (f32:8, bf16:16, i8:32).
    max_item = max(jnp.dtype(a.dtype).itemsize for a in arrs2d)
    row_align = {4: 8, 2: 16, 1: 32}.get(max_item, 8)

    # Row tile from a VMEM byte budget: 6 inputs x 2 pipeline buffers per row.
    bytes_per_row = sum(2 * Dv * jnp.dtype(a.dtype).itemsize for a in arrs2d)
    tb = min(_INPUT_VMEM_BUDGET // bytes_per_row, _MAX_BLOCK_ROWS, _round_up(N, row_align))
    if tb >= _REDUCE_CHUNK:
        tb = tb // _REDUCE_CHUNK * _REDUCE_CHUNK        # 512 is a multiple of every align
        chunk = _REDUCE_CHUNK
    else:
        tb = max(row_align, tb // row_align * row_align)
        chunk = tb
    nblk = pl.cdiv(N, tb)
    need_mask = (N % tb) != 0                           # only the ragged last block needs it

    vmem_need = tb * bytes_per_row + 3 * 2 * 8 * Dv * 4
    vmem_limit = int(min(max(vmem_need + (8 << 20), 16 << 20), 56 << 20))

    q_arr = jnp.asarray([quantile], dtype=jnp.float32)
    in_spec = pl.BlockSpec((tb, D), lambda i, _q: (i, 0))
    out_spec = pl.BlockSpec((1, 8, D), lambda i, _q: (i, 0, 0))
    part_shape = jax.ShapeDtypeStruct((nblk, 8, D), jnp.float32)

    kernel = functools.partial(_e2e_loss_kernel, tb=tb, d=D, chunk=chunk,
                               n_rows=N, need_mask=need_mask)

    qpart, vpart, spart = pl.pallas_call(
        kernel,
        out_shape=(part_shape, part_shape, part_shape),
        grid_spec=pltpu.PrefetchScalarGridSpec(
            num_scalar_prefetch=1,
            grid=(nblk,),
            in_specs=[in_spec] * 6,
            out_specs=[out_spec] * 3,
        ),
        compiler_params=pltpu.CompilerParams(
            dimension_semantics=("parallel",),          # independent blocks -> megacore
            vmem_limit_bytes=vmem_limit),
    )(q_arr, *arrs2d)

    # Tiny final reduction + scalar glue in plain JAX (padding contributes exact 0,
    # means divide by the true element counts).
    q_loss = jnp.sum(qpart) / arrs2d[0].size
    vlt_loss = jnp.sum(vpart) / arrs2d[2].size
    sf_loss = jnp.sum(spart) / arrs2d[4].size
    loss = q_loss + lmd_1 * vlt_loss + lmd_2 * sf_loss
    return q_loss, loss


def _reference(vlt_o, vlt_t, sf_o, sf_t, out, target, q):
    def pinball(x, t):
        x = jnp.asarray(x, jnp.float32)
        t = jnp.asarray(t, jnp.float32)
        d = x - t
        return jnp.mean(q * jnp.maximum(-d, 0.0) + (1.0 - q) * jnp.maximum(d, 0.0))
    ql = pinball(out, target)
    vl = pinball(vlt_o, vlt_t)
    sl = pinball(sf_o, sf_t)
    return ql, ql + LMD_1 * vl + LMD_2 * sl


if __name__ == "__main__":
    key = jax.random.PRNGKey(0)
    quantile = 0.9

    def run_case(n, d, dtype, tag):
        ks = jax.random.split(jax.random.fold_in(key, n * 131 + d), 6)
        mk = lambda k: jax.random.normal(k, (n, d), jnp.float32).astype(dtype)
        vlt_o, vlt_t, sf_o, sf_t, out, target = (mk(k) for k in ks)

        q_loss, loss = e2e_v6_loss(vlt_o, vlt_t, sf_o, sf_t, out, target, quantile)
        jax.block_until_ready((q_loss, loss))

        ref_q, ref_loss = _reference(vlt_o, vlt_t, sf_o, sf_t, out, target, quantile)
        assert jnp.allclose(q_loss, ref_q, rtol=1e-5, atol=1e-5), (tag, q_loss, ref_q)
        assert jnp.allclose(loss, ref_loss, rtol=1e-5, atol=1e-5), (tag, loss, ref_loss)

    run_case(30, 96, jnp.float32, "ragged-f32")     # row mask + non-128 lane dim
    run_case(64, 128, jnp.float32, "aligned-f32")   # fully aligned, no masking
    run_case(40, 128, jnp.bfloat16, "ragged-bf16")  # native bf16 stream, f32 accumulate

    print("KERNEL_OK")
</pallas_src>

<mosaic_0001>
module attributes {stable_mosaic.version = 11 : i64} {
  func.func @_e2e_loss_kernel(%arg0: i32, %arg1: memref<1xf32, #tpu.memory_space<smem>>, %arg2: memref<32x96xf32, #tpu.memory_space<vmem>>, %arg3: memref<32x96xf32, #tpu.memory_space<vmem>>, %arg4: memref<32x96xf32, #tpu.memory_space<vmem>>, %arg5: memref<32x96xf32, #tpu.memory_space<vmem>>, %arg6: memref<32x96xf32, #tpu.memory_space<vmem>>, %arg7: memref<32x96xf32, #tpu.memory_space<vmem>>, %arg8: memref<1x8x96xf32, #tpu.memory_space<vmem>>, %arg9: memref<1x8x96xf32, #tpu.memory_space<vmem>>, %arg10: memref<1x8x96xf32, #tpu.memory_space<vmem>>) attributes {dimension_semantics = [#tpu.dimension_semantics<parallel>], iteration_bounds = array<i64: 1>, scalar_prefetch = 1 : i64, scratch_operands = 0 : i64, tpu.core_type = #tpu.core_type<tc>, window_params = [{transform_indices = @transform_0, window_bounds = array<i64: 32, 96>}, {transform_indices = @transform_1, window_bounds = array<i64: 32, 96>}, {transform_indices = @transform_2, window_bounds = array<i64: 32, 96>}, {transform_indices = @transform_3, window_bounds = array<i64: 32, 96>}, {transform_indices = @transform_4, window_bounds = array<i64: 32, 96>}, {transform_indices = @transform_5, window_bounds = array<i64: 32, 96>}, {transform_indices = @transform_6, window_bounds = array<i64: 1, 8, 96>}, {transform_indices = @transform_7, window_bounds = array<i64: 1, 8, 96>}, {transform_indices = @transform_8, window_bounds = array<i64: 1, 8, 96>}]} {
    %c0 = arith.constant 0 : index
    %0 = memref.load %arg1[%c0] : memref<1xf32, #tpu.memory_space<smem>>
    %cst = arith.constant 0.000000e+00 : f32
    %1 = arith.subf %cst, %0 : f32
    %cst_0 = arith.constant 1.000000e+00 : f32
    %2 = arith.subf %cst_0, %0 : f32
    %c32_i32 = arith.constant 32 : i32
    %3 = arith.muli %arg0, %c32_i32 : i32
    %cst_1 = arith.constant 0.000000e+00 : f32
    %4 = vector.broadcast %cst_1 : f32 to vector<8x96xf32>
    %cst_2 = arith.constant 0.000000e+00 : f32
    %5 = vector.broadcast %cst_2 : f32 to vector<8x96xf32>
    %cst_3 = arith.constant 0.000000e+00 : f32
    %6 = vector.broadcast %cst_3 : f32 to vector<8x96xf32>
    %7 = tpu.iota {dimensions = array<i32: 0>} : vector<32x96xi32>
    %c0_i32 = arith.constant 0 : i32
    %8 = arith.addi %3, %c0_i32 : i32
    %9 = vector.broadcast %8 : i32 to vector<32x96xi32>
    %10 = arith.addi %7, %9 : vector<32x96xi32>
    %c30_i32 = arith.constant 30 : i32
    %11 = vector.broadcast %c30_i32 : i32 to vector<32x96xi32>
    %12 = arith.cmpi slt, %10, %11 : vector<32x96xi32>
    %c0_4 = arith.constant 0 : index
    %c0_5 = arith.constant 0 : index
    %13 = vector.load %arg2[%c0_4, %c0_5] : memref<32x96xf32, #tpu.memory_space<vmem>>, vector<32x96xf32>
    %c0_6 = arith.constant 0 : index
    %c0_7 = arith.constant 0 : index
    %14 = vector.load %arg3[%c0_6, %c0_7] : memref<32x96xf32, #tpu.memory_space<vmem>>, vector<32x96xf32>
    %15 = arith.subf %13, %14 : vector<32x96xf32>
    %16 = vector.broadcast %1 : f32 to vector<32x96xf32>
    %17 = arith.mulf %16, %15 : vector<32x96xf32>
    %18 = vector.broadcast %2 : f32 to vector<32x96xf32>
    %19 = arith.mulf %18, %15 : vector<32x96xf32>
    %20 = arith.maximumf %17, %19 : vector<32x96xf32>
    %cst_8 = arith.constant 0.000000e+00 : f32
    %21 = vector.broadcast %cst_8 : f32 to vector<32x96xf32>
    %22 = arith.select %12, %20, %21 : vector<32x96xi1>, vector<32x96xf32>
    %23 = vector.shape_cast %22 : vector<32x96xf32> to vector<4x8x96xf32>
    %cst_9 = arith.constant dense<0.000000e+00> : vector<8x96xf32>
    %24 = vector.multi_reduction <add>, %23, %cst_9 [0] : vector<4x8x96xf32> to vector<8x96xf32>
    %25 = arith.addf %4, %24 : vector<8x96xf32>
    %c0_10 = arith.constant 0 : index
    %c0_11 = arith.constant 0 : index
    %26 = vector.load %arg4[%c0_10, %c0_11] : memref<32x96xf32, #tpu.memory_space<vmem>>, vector<32x96xf32>
    %c0_12 = arith.constant 0 : index
    %c0_13 = arith.constant 0 : index
    %27 = vector.load %arg5[%c0_12, %c0_13] : memref<32x96xf32, #tpu.memory_space<vmem>>, vector<32x96xf32>
    %28 = arith.subf %26, %27 : vector<32x96xf32>
    %29 = vector.broadcast %1 : f32 to vector<32x96xf32>
    %30 = arith.mulf %29, %28 : vector<32x96xf32>
    %31 = vector.broadcast %2 : f32 to vector<32x96xf32>
    %32 = arith.mulf %31, %28 : vector<32x96xf32>
    %33 = arith.maximumf %30, %32 : vector<32x96xf32>
    %cst_14 = arith.constant 0.000000e+00 : f32
    %34 = vector.broadcast %cst_14 : f32 to vector<32x96xf32>
    %35 = arith.select %12, %33, %34 : vector<32x96xi1>, vector<32x96xf32>
    %36 = vector.shape_cast %35 : vector<32x96xf32> to vector<4x8x96xf32>
    %cst_15 = arith.constant dense<0.000000e+00> : vector<8x96xf32>
    %37 = vector.multi_reduction <add>, %36, %cst_15 [0] : vector<4x8x96xf32> to vector<8x96xf32>
    %38 = arith.addf %5, %37 : vector<8x96xf32>
    %c0_16 = arith.constant 0 : index
    %c0_17 = arith.constant 0 : index
    %39 = vector.load %arg6[%c0_16, %c0_17] : memref<32x96xf32, #tpu.memory_space<vmem>>, vector<32x96xf32>
    %c0_18 = arith.constant 0 : index
    %c0_19 = arith.constant 0 : index
    %40 = vector.load %arg7[%c0_18, %c0_19] : memref<32x96xf32, #tpu.memory_space<vmem>>, vector<32x96xf32>
    %41 = arith.subf %39, %40 : vector<32x96xf32>
    %42 = vector.broadcast %1 : f32 to vector<32x96xf32>
    %43 = arith.mulf %42, %41 : vector<32x96xf32>
    %44 = vector.broadcast %2 : f32 to vector<32x96xf32>
    %45 = arith.mulf %44, %41 : vector<32x96xf32>
    %46 = arith.maximumf %43, %45 : vector<32x96xf32>
    %cst_20 = arith.constant 0.000000e+00 : f32
    %47 = vector.broadcast %cst_20 : f32 to vector<32x96xf32>
    %48 = arith.select %12, %46, %47 : vector<32x96xi1>, vector<32x96xf32>
    %49 = vector.shape_cast %48 : vector<32x96xf32> to vector<4x8x96xf32>
    %cst_21 = arith.constant dense<0.000000e+00> : vector<8x96xf32>
    %50 = vector.multi_reduction <add>, %49, %cst_21 [0] : vector<4x8x96xf32> to vector<8x96xf32>
    %51 = arith.addf %6, %50 : vector<8x96xf32>
    %52 = vector.shape_cast %25 : vector<8x96xf32> to vector<1x8x96xf32>
    %c0_22 = arith.constant 0 : index
    %c0_23 = arith.constant 0 : index
    %c0_24 = arith.constant 0 : index
    %53 = vector.load %arg8[%c0_22, %c0_23, %c0_24] : memref<1x8x96xf32, #tpu.memory_space<vmem>>, vector<1x8x96xf32>
    tpu.vector_store %arg8[%c0_22, %c0_23, %c0_24], %52 {strides = array<i32>} : memref<1x8x96xf32, #tpu.memory_space<vmem>>, vector<1x8x96xf32>,
    %54 = vector.shape_cast %38 : vector<8x96xf32> to vector<1x8x96xf32>
    %c0_25 = arith.constant 0 : index
    %c0_26 = arith.constant 0 : index
    %c0_27 = arith.constant 0 : index
    %55 = vector.load %arg9[%c0_25, %c0_26, %c0_27] : memref<1x8x96xf32, #tpu.memory_space<vmem>>, vector<1x8x96xf32>
    tpu.vector_store %arg9[%c0_25, %c0_26, %c0_27], %54 {strides = array<i32>} : memref<1x8x96xf32, #tpu.memory_space<vmem>>, vector<1x8x96xf32>,
    %56 = vector.shape_cast %51 : vector<8x96xf32> to vector<1x8x96xf32>
    %c0_28 = arith.constant 0 : index
    %c0_29 = arith.constant 0 : index
    %c0_30 = arith.constant 0 : index
    %57 = vector.load %arg10[%c0_28, %c0_29, %c0_30] : memref<1x8x96xf32, #tpu.memory_space<vmem>>, vector<1x8x96xf32>
    tpu.vector_store %arg10[%c0_28, %c0_29, %c0_30], %56 {strides = array<i32>} : memref<1x8x96xf32, #tpu.memory_space<vmem>>, vector<1x8x96xf32>,
    return
  }
  func.func @transform_0(%arg0: i32, %arg1: memref<1xf32, #tpu.memory_space<smem>>) -> (i32, i32) {
    %c0_i32 = arith.constant 0 : i32
    %c0_i32_0 = arith.constant 0 : i32
    return %arg0, %c0_i32 : i32, i32
  }
  func.func @transform_1(%arg0: i32, %arg1: memref<1xf32, #tpu.memory_space<smem>>) -> (i32, i32) {
    %c0_i32 = arith.constant 0 : i32
    %c0_i32_0 = arith.constant 0 : i32
    return %arg0, %c0_i32 : i32, i32
  }
  func.func @transform_2(%arg0: i32, %arg1: memref<1xf32, #tpu.memory_space<smem>>) -> (i32, i32) {
    %c0_i32 = arith.constant 0 : i32
    %c0_i32_0 = arith.constant 0 : i32
    return %arg0, %c0_i32 : i32, i32
  }
  func.func @transform_3(%arg0: i32, %arg1: memref<1xf32, #tpu.memory_space<smem>>) -> (i32, i32) {
    %c0_i32 = arith.constant 0 : i32
    %c0_i32_0 = arith.constant 0 : i32
    return %arg0, %c0_i32 : i32, i32
  }
  func.func @transform_4(%arg0: i32, %arg1: memref<1xf32, #tpu.memory_space<smem>>) -> (i32, i32) {
    %c0_i32 = arith.constant 0 : i32
    %c0_i32_0 = arith.constant 0 : i32
    return %arg0, %c0_i32 : i32, i32
  }
  func.func @transform_5(%arg0: i32, %arg1: memref<1xf32, #tpu.memory_space<smem>>) -> (i32, i32) {
    %c0_i32 = arith.constant 0 : i32
    %c0_i32_0 = arith.constant 0 : i32
    return %arg0, %c0_i32 : i32, i32
  }
  func.func @transform_6(%arg0: i32, %arg1: memref<1xf32, #tpu.memory_space<smem>>) -> (i32, i32, i32) {
    %c0_i32 = arith.constant 0 : i32
    %c0_i32_0 = arith.constant 0 : i32
    %c0_i32_1 = arith.constant 0 : i32
    return %arg0, %c0_i32, %c0_i32_0 : i32, i32, i32
  }
  func.func @transform_7(%arg0: i32, %arg1: memref<1xf32, #tpu.memory_space<smem>>) -> (i32, i32, i32) {
    %c0_i32 = arith.constant 0 : i32
    %c0_i32_0 = arith.constant 0 : i32
    %c0_i32_1 = arith.constant 0 : i32
    return %arg0, %c0_i32, %c0_i32_0 : i32, i32, i32
  }
  func.func @transform_8(%arg0: i32, %arg1: memref<1xf32, #tpu.memory_space<smem>>) -> (i32, i32, i32) {
    %c0_i32 = arith.constant 0 : i32
    %c0_i32_0 = arith.constant 0 : i32
    %c0_i32_1 = arith.constant 0 : i32
    return %arg0, %c0_i32, %c0_i32_0 : i32, i32, i32
  }
}

</mosaic_0001>

<llo_original>
// kernel: tpu_custom_call.1
$region0: #{tpu_custom_call.1}
  #allocation0 [shape = 'u32[]', space=smem, size = 0x4, offset = 0x4, fixed_abs, tag = 'smem constant byte address 0x4 - core index']
  #allocation1 [shape = 'u32[144,128]{1,0:T(1,128)}', space=vmem, size = 0x12000, scoped, tag = 'internal scratch']
  #allocation2 [shape = 's32[1]{0}', space=sflag, size = 0x4, scoped, tag = 'scoped memory for tpu_custom_call.1']
  #allocation3 [shape = 'f32[1]{0:T(128)S(6)}', space=smem, size = 0x200, scoped, tag = 'prefetched SMEM operand 0']
  %s0 = inlined_call_operand.<no memory space> [shape: f32[1], index: 0, kind: input, shape index: {}]
  %s1 = inlined_call_operand.hbm [shape: f32[30,96], index: 1, kind: input, shape index: {}]
  %s2 = inlined_call_operand.hbm [shape: f32[30,96], index: 2, kind: input, shape index: {}]
  %s3 = inlined_call_operand.hbm [shape: f32[30,96], index: 3, kind: input, shape index: {}]
  %s4 = inlined_call_operand.hbm [shape: f32[30,96], index: 4, kind: input, shape index: {}]
  %s5 = inlined_call_operand.hbm [shape: f32[30,96], index: 5, kind: input, shape index: {}]
  %s6 = inlined_call_operand.hbm [shape: f32[30,96], index: 6, kind: input, shape index: {}]
  %s7 = inlined_call_operand.hbm [shape: f32[1,8,96], index: 7, kind: output, shape index: {0}]
  %s8 = inlined_call_operand.hbm [shape: f32[1,8,96], index: 8, kind: output, shape index: {1}]
  %s9 = inlined_call_operand.hbm [shape: f32[1,8,96], index: 9, kind: output, shape index: {2}]
  %10 = xla_tuple %s7, %s8, %s9
  %s11 = sld [smem:[#allocation0]]
  $region74: #{tpu_custom_call.1} parent=0
    _
  %s13 = ssub.s32 1, %s11
  %s14 = scalar_select 0, %s13, %s11
  %15 = sst [smem:[#allocation3]] %s0
  $region1: #{tpu_custom_call.1} parent=0
    #allocation4 [shape = 'u8[16384]{0}', space=vmem, size = 0x4000, scoped, tag = 'input window, operand 1, single buffered']
    #allocation5 [shape = 's32[1]{0}', space=sflag, size = 0x4, scoped, tag = 'scoped memory for tpu_custom_call.1']
    #allocation6 [shape = 's32[1]{0}', space=sflag, size = 0x4, scoped, tag = 'scoped memory for tpu_custom_call.1']
    #allocation7 [shape = 'u8[16384]{0}', space=vmem, size = 0x4000, scoped, tag = 'input window, operand 2, single buffered']
    #allocation8 [shape = 's32[1]{0}', space=sflag, size = 0x4, scoped, tag = 'scoped memory for tpu_custom_call.1']
    #allocation9 [shape = 'u8[16384]{0}', space=vmem, size = 0x4000, scoped, tag = 'input window, operand 3, single buffered']
    #allocation10 [shape = 'u8[16384]{0}', space=vmem, size = 0x4000, scoped, tag = 'input window, operand 4, single buffered']
    #allocation11 [shape = 's32[1]{0}', space=sflag, size = 0x4, scoped, tag = 'scoped memory for tpu_custom_call.1']
    #allocation12 [shape = 'u8[16384]{0}', space=vmem, size = 0x4000, scoped, tag = 'input window, operand 5, single buffered']
    #allocation13 [shape = 'u8[16384]{0}', space=vmem, size = 0x4000, scoped, tag = 'input window, operand 6, single buffered']
    #allocation14 [shape = 's32[1]{0}', space=sflag, size = 0x4, scoped, tag = 'scoped memory for tpu_custom_call.1']
    #allocation15 [shape = 'u8[4096]{0}', space=vmem, size = 0x1000, scoped, tag = 'output window, operand 0, single buffered']
    #allocation16 [shape = 'u8[4096]{0}', space=vmem, size = 0x1000, scoped, tag = 'output window, operand 1, single buffered']
    #allocation17 [shape = 's32[1]{0}', space=sflag, size = 0x4, scoped, tag = 'scoped memory for tpu_custom_call.1']
    #allocation18 [shape = 'u8[4096]{0}', space=vmem, size = 0x1000, scoped, tag = 'output window, operand 2, single buffered']
    %16 = vsyncpa [#allocation5], 0
    %17 = vsyncpa [#allocation8], 0
    %18 = vsyncpa [#allocation11], 0
    %19 = vsyncpa [#allocation14], 0
    %20 = vsyncpa [#allocation6], 0
    %21 = vsyncpa [#allocation17], 0
    // Predicated region
    $region2: #{tpu_custom_call.1} parent=1 // pred_check
      _
    $region3: #{tpu_custom_call.1} parent=1 // pred_check_branch
      %23 = sbr.rel (0) target = $region5
    $region4: #{tpu_custom_call.1} parent=1 // pred_region
      %s25 = ssub.s32 512, 512
      %26 = vsyncadd [#allocation5], %s25
      %s27 = sshll.u32 [#allocation4], 4
      %s28 = int_to_ptr.vmem [resolvable:$true] %s27
      %33 = dma.hbm_to_vmem [thread:$0]  %s1, 512, %s28, [#allocation5], 128, 128, 8
    $region5: #{tpu_custom_call.1} parent=1 // pred_fallthru
      _
    // Predicated region
    $region6: #{tpu_custom_call.1} parent=1 // pred_check
      _
    $region7: #{tpu_custom_call.1} parent=1 // pred_check_branch
      %35 = sbr.rel (0) target = $region9
    $region8: #{tpu_custom_call.1} parent=1 // pred_region
      %s37 = ssub.s32 512, 512
      %38 = vsyncadd [#allocation8], %s37
      %s39 = sshll.u32 [#allocation7], 4
      %s40 = int_to_ptr.vmem [resolvable:$true] %s39
      %45 = dma.hbm_to_vmem [thread:$0]  %s2, 512, %s40, [#allocation8], 128, 128, 8
    $region9: #{tpu_custom_call.1} parent=1 // pred_fallthru
      _
    // Predicated region
    $region10: #{tpu_custom_call.1} parent=1 // pred_check
      _
    $region11: #{tpu_custom_call.1} parent=1 // pred_check_branch
      %47 = sbr.rel (0) target = $region13
    $region12: #{tpu_custom_call.1} parent=1 // pred_region
      %s49 = ssub.s32 512, 512
      %50 = vsyncadd [#allocation8], %s49
      %s51 = sshll.u32 [#allocation9], 4
      %s52 = int_to_ptr.vmem [resolvable:$true] %s51
      %57 = dma.hbm_to_vmem [thread:$0]  %s3, 512, %s52, [#allocation8], 128, 128, 8
    $region13: #{tpu_custom_call.1} parent=1 // pred_fallthru
      _
    // Predicated region
    $region14: #{tpu_custom_call.1} parent=1 // pred_check
      _
    $region15: #{tpu_custom_call.1} parent=1 // pred_check_branch
      %59 = sbr.rel (0) target = $region17
    $region16: #{tpu_custom_call.1} parent=1 // pred_region
      %s61 = ssub.s32 512, 512
      %62 = vsyncadd [#allocation11], %s61
      %s63 = sshll.u32 [#allocation10], 4
      %s64 = int_to_ptr.vmem [resolvable:$true] %s63
      %69 = dma.hbm_to_vmem [thread:$0]  %s4, 512, %s64, [#allocation11], 128, 128, 8
    $region17: #{tpu_custom_call.1} parent=1 // pred_fallthru
      _
    // Predicated region
    $region18: #{tpu_custom_call.1} parent=1 // pred_check
      _
    $region19: #{tpu_custom_call.1} parent=1 // pred_check_branch
      %71 = sbr.rel (0) target = $region21
    $region20: #{tpu_custom_call.1} parent=1 // pred_region
      %s73 = ssub.s32 512, 512
      %74 = vsyncadd [#allocation11], %s73
      %s75 = sshll.u32 [#allocation12], 4
      %s76 = int_to_ptr.vmem [resolvable:$true] %s75
      %81 = dma.hbm_to_vmem [thread:$0]  %s5, 512, %s76, [#allocation11], 128, 128, 8
    $region21: #{tpu_custom_call.1} parent=1 // pred_fallthru
      _
    // Predicated region
    $region22: #{tpu_custom_call.1} parent=1 // pred_check
      _
    $region23: #{tpu_custom_call.1} parent=1 // pred_check_branch
      %83 = sbr.rel (0) target = $region25
    $region24: #{tpu_custom_call.1} parent=1 // pred_region
      %s85 = ssub.s32 512, 512
      %86 = vsyncadd [#allocation14], %s85
      %s87 = sshll.u32 [#allocation13], 4
      %s88 = int_to_ptr.vmem [resolvable:$true] %s87
      %93 = dma.hbm_to_vmem [thread:$0]  %s6, 512, %s88, [#allocation14], 128, 128, 8
    $region25: #{tpu_custom_call.1} parent=1 // pred_fallthru
      _
    // Predicated region
    $region26: #{tpu_custom_call.1} parent=1 // pred_check
      _
    $region27: #{tpu_custom_call.1} parent=1 // pred_check_branch
      %95 = sbr.rel (0) target = $region29
    $region28: #{tpu_custom_call.1} parent=1 // pred_region
      %96 = dma.done [#allocation5], 512
    $region29: #{tpu_custom_call.1} parent=1 // pred_fallthru
      _
    // Predicated region
    $region30: #{tpu_custom_call.1} parent=1 // pred_check
      _
    $region31: #{tpu_custom_call.1} parent=1 // pred_check_branch
      %98 = sbr.rel (0) target = $region33
    $region32: #{tpu_custom_call.1} parent=1 // pred_region
      %99 = dma.done [#allocation8], 512
    $region33: #{tpu_custom_call.1} parent=1 // pred_fallthru
      _
    // Predicated region
    $region34: #{tpu_custom_call.1} parent=1 // pred_check
      _
    $region35: #{tpu_custom_call.1} parent=1 // pred_check_branch
      %101 = sbr.rel (0) target = $region37
    $region36: #{tpu_custom_call.1} parent=1 // pred_region
      %102 = dma.done [#allocation8], 512
    $region37: #{tpu_custom_call.1} parent=1 // pred_fallthru
      _
    // Predicated region
    $region38: #{tpu_custom_call.1} parent=1 // pred_check
      _
    $region39: #{tpu_custom_call.1} parent=1 // pred_check_branch
      %104 = sbr.rel (0) target = $region41
    $region40: #{tpu_custom_call.1} parent=1 // pred_region
      %105 = dma.done [#allocation11], 512
    $region41: #{tpu_custom_call.1} parent=1 // pred_fallthru
      _
    // Predicated region
    $region42: #{tpu_custom_call.1} parent=1 // pred_check
      _
    $region43: #{tpu_custom_call.1} parent=1 // pred_check_branch
      %107 = sbr.rel (0) target = $region45
    $region44: #{tpu_custom_call.1} parent=1 // pred_region
      %108 = dma.done [#allocation11], 512
    $region45: #{tpu_custom_call.1} parent=1 // pred_fallthru
      _
    // Predicated region
    $region46: #{tpu_custom_call.1} parent=1 // pred_check
      _
    $region47: #{tpu_custom_call.1} parent=1 // pred_check_branch
      %110 = sbr.rel (0) target = $region49
    $region48: #{tpu_custom_call.1} parent=1 // pred_region
      %111 = dma.done [#allocation14], 512
    $region49: #{tpu_custom_call.1} parent=1 // pred_fallthru
      _
    %s112 = sld [smem:[#allocation3]]
    %s113 = ssub.f32 0.0, %s112
    %s114 = ssub.f32 1.0, %s112
    %s115 = smul.u32 0, 32
    %v116 = vlaneseq
    %v117 = vshrl.u32 %v116, 7
    %v118 = vadd.s32 %v117, 8
    %v119 = vadd.s32 %v117, 16
    %v120 = vadd.s32 %v117, 24
    %v121 = vstv %s115
    %v122 = vadd.s32 %v117, %v121
    %v123 = vadd.s32 %v118, %v121
    %v124 = vadd.s32 %v119, %v121
    %v125 = vadd.s32 %v120, %v121
    %vm126 = vcmp.lt.s32.totalorder %v122, 30
    %vm127 = vcmp.lt.s32.totalorder %v123, 30
    %vm128 = vcmp.lt.s32.totalorder %v124, 30
    %vm129 = vcmp.lt.s32.totalorder %v125, 30
    %v130 = vld [vmem:[#allocation4] sm:$0xff]
    %v131 = vld [vmem:[#allocation4 + $0x8] sm:$0xff]
    %v132 = vld [vmem:[#allocation4 + $0x10] sm:$0xff]
    %v133 = vld [vmem:[#allocation4 + $0x18] sm:$0xff]
    %v134 = vld [vmem:[#allocation7] sm:$0xff]
    %v135 = vld [vmem:[#allocation7 + $0x8] sm:$0xff]
    %v136 = vld [vmem:[#allocation7 + $0x10] sm:$0xff]
    %v137 = vld [vmem:[#allocation7 + $0x18] sm:$0xff]
    %v138 = vsub.f32 %v130, %v134
    %v139 = vsub.f32 %v131, %v135
    %v140 = vsub.f32 %v132, %v136
    %v141 = vsub.f32 %v133, %v137
    %v142 = vstv %s113
    %v143 = vmul.f32 %v142, %v138
    %v144 = vmul.f32 %v142, %v139
    %v145 = vmul.f32 %v142, %v140
    %v146 = vmul.f32 %v142, %v141
    %v147 = vstv %s114
    %v148 = vmul.f32 %v147, %v138
    %v149 = vmul.f32 %v147, %v139
    %v150 = vmul.f32 %v147, %v140
    %v151 = vmul.f32 %v147, %v141
    %v152 = vmax.f32 %v143, %v148
    %v153 = vmax.f32 %v144, %v149
    %v154 = vmax.f32 %v145, %v150
    %v155 = vmax.f32 %v146, %v151
    %v156 = vsel %vm126, %v152, 0.0
    %v157 = vsel %vm127, %v153, 0.0
    %v158 = vsel %vm128, %v154, 0.0
    %v159 = vsel %vm129, %v155, 0.0
    %vm160 = vcmask 785408
    %v161 = vsel %vm160, %v156, 0.0
    %v162 = vsel %vm160, %v157, 0.0
    %v163 = vadd.f32 %v161, %v162
    %v164 = vsel %vm160, %v158, 0.0
    %v165 = vadd.f32 %v163, %v164
    %v166 = vsel %vm160, %v159, 0.0
    %v167 = vadd.f32 %v165, %v166
    %v168 = vadd.f32 %v167, 0.0
    %v169 = vld [vmem:[#allocation9] sm:$0xff]
    %v170 = vld [vmem:[#allocation9 + $0x8] sm:$0xff]
    %v171 = vld [vmem:[#allocation9 + $0x10] sm:$0xff]
    %v172 = vld [vmem:[#allocation9 + $0x18] sm:$0xff]
    %v173 = vld [vmem:[#allocation10] sm:$0xff]
    %v174 = vld [vmem:[#allocation10 + $0x8] sm:$0xff]
    %v175 = vld [vmem:[#allocation10 + $0x10] sm:$0xff]
    %v176 = vld [vmem:[#allocation10 + $0x18] sm:$0xff]
    %v177 = vsub.f32 %v169, %v173
    %v178 = vsub.f32 %v170, %v174
    %v179 = vsub.f32 %v171, %v175
    %v180 = vsub.f32 %v172, %v176
    %v181 = vmul.f32 %v142, %v177
    %v182 = vmul.f32 %v142, %v178
    %v183 = vmul.f32 %v142, %v179
    %v184 = vmul.f32 %v142, %v180
    %v185 = vmul.f32 %v147, %v177
    %v186 = vmul.f32 %v147, %v178
    %v187 = vmul.f32 %v147, %v179
    %v188 = vmul.f32 %v147, %v180
    %v189 = vmax.f32 %v181, %v185
    %v190 = vmax.f32 %v182, %v186
    %v191 = vmax.f32 %v183, %v187
    %v192 = vmax.f32 %v184, %v188
    %v193 = vsel %vm126, %v189, 0.0
    %v194 = vsel %vm127, %v190, 0.0
    %v195 = vsel %vm128, %v191, 0.0
    %v196 = vsel %vm129, %v192, 0.0
    %v197 = vsel %vm160, %v193, 0.0
    %v198 = vsel %vm160, %v194, 0.0
    %v199 = vadd.f32 %v197, %v198
    %v200 = vsel %vm160, %v195, 0.0
    %v201 = vadd.f32 %v199, %v200
    %v202 = vsel %vm160, %v196, 0.0
    %v203 = vadd.f32 %v201, %v202
    %v204 = vadd.f32 %v203, 0.0
    %v205 = vld [vmem:[#allocation12] sm:$0xff]
    %v206 = vld [vmem:[#allocation12 + $0x8] sm:$0xff]
    %v207 = vld [vmem:[#allocation12 + $0x10] sm:$0xff]
    %v208 = vld [vmem:[#allocation12 + $0x18] sm:$0xff]
    %v209 = vld [vmem:[#allocation13] sm:$0xff]
    %v210 = vld [vmem:[#allocation13 + $0x8] sm:$0xff]
    %v211 = vld [vmem:[#allocation13 + $0x10] sm:$0xff]
    %v212 = vld [vmem:[#allocation13 + $0x18] sm:$0xff]
    %v213 = vsub.f32 %v205, %v209
    %v214 = vsub.f32 %v206, %v210
    %v215 = vsub.f32 %v207, %v211
    %v216 = vsub.f32 %v208, %v212
    %v217 = vmul.f32 %v142, %v213
    %v218 = vmul.f32 %v142, %v214
    %v219 = vmul.f32 %v142, %v215
    %v220 = vmul.f32 %v142, %v216
    %v221 = vmul.f32 %v147, %v213
    %v222 = vmul.f32 %v147, %v214
    %v223 = vmul.f32 %v147, %v215
    %v224 = vmul.f32 %v147, %v216
    %v225 = vmax.f32 %v217, %v221
    %v226 = vmax.f32 %v218, %v222
    %v227 = vmax.f32 %v219, %v223
    %v228 = vmax.f32 %v220, %v224
    %v229 = vsel %vm126, %v225, 0.0
    %v230 = vsel %vm127, %v226, 0.0
    %v231 = vsel %vm128, %v227, 0.0
    %v232 = vsel %vm129, %v228, 0.0
    %v233 = vsel %vm160, %v229, 0.0
    %v234 = vsel %vm160, %v230, 0.0
    %v235 = vadd.f32 %v233, %v234
    %v236 = vsel %vm160, %v231, 0.0
    %v237 = vadd.f32 %v235, %v236
    %v238 = vsel %vm160, %v232, 0.0
    %v239 = vadd.f32 %v237, %v238
    %v240 = vadd.f32 %v239, 0.0
    %241 = vst.msk [vmem:[#allocation15] sm:$0xff] %vm160, %v168
    %242 = vst.msk [vmem:[#allocation16] sm:$0xff] %vm160, %v204
    %243 = vst.msk [vmem:[#allocation18] sm:$0xff] %vm160, %v240
    // Predicated region
    $region50: #{tpu_custom_call.1} parent=1 // pred_check
      _
    $region51: #{tpu_custom_call.1} parent=1 // pred_check_branch
      %245 = sbr.rel (0) target = $region53
    $region52: #{tpu_custom_call.1} parent=1 // pred_region
      %s247 = ssub.s32 128, 128
      %248 = vsyncadd [#allocation6], %s247
      %s250 = sshll.u32 [#allocation15], 4
      %s251 = int_to_ptr.vmem [resolvable:$true] %s250
      %253 = dma.vmem_to_hbm [thread:$0]  %s251, 128, %s7, [#allocation6]
    $region53: #{tpu_custom_call.1} parent=1 // pred_fallthru
      _
    // Predicated region
    $region54: #{tpu_custom_call.1} parent=1 // pred_check
      _
    $region55: #{tpu_custom_call.1} parent=1 // pred_check_branch
      %255 = sbr.rel (0) target = $region57
    $region56: #{tpu_custom_call.1} parent=1 // pred_region
      %s257 = ssub.s32 128, 128
      %258 = vsyncadd [#allocation17], %s257
      %s260 = sshll.u32 [#allocation16], 4
      %s261 = int_to_ptr.vmem [resolvable:$true] %s260
      %263 = dma.vmem_to_hbm [thread:$0]  %s261, 128, %s8, [#allocation17]
    $region57: #{tpu_custom_call.1} parent=1 // pred_fallthru
      _
    // Predicated region
    $region58: #{tpu_custom_call.1} parent=1 // pred_check
      _
    $region59: #{tpu_custom_call.1} parent=1 // pred_check_branch
      %265 = sbr.rel (0) target = $region61
    $region60: #{tpu_custom_call.1} parent=1 // pred_region
      %s267 = ssub.s32 128, 128
      %268 = vsyncadd [#allocation17], %s267
      %s270 = sshll.u32 [#allocation18], 4
      %s271 = int_to_ptr.vmem [resolvable:$true] %s270
      %273 = dma.vmem_to_hbm [thread:$0]  %s271, 128, %s9, [#allocation17]
    $region61: #{tpu_custom_call.1} parent=1 // pred_fallthru
      _
    // Predicated region
    $region62: #{tpu_custom_call.1} parent=1 // pred_check
      _
    $region63: #{tpu_custom_call.1} parent=1 // pred_check_branch
      %275 = sbr.rel (0) target = $region65
    $region64: #{tpu_custom_call.1} parent=1 // pred_region
      %276 = dma.done [#allocation6], 128
    $region65: #{tpu_custom_call.1} parent=1 // pred_fallthru
      _
    // Predicated region
    $region66: #{tpu_custom_call.1} parent=1 // pred_check
      _
    $region67: #{tpu_custom_call.1} parent=1 // pred_check_branch
      %278 = sbr.rel (0) target = $region69
    $region68: #{tpu_custom_call.1} parent=1 // pred_region
      %279 = dma.done [#allocation17], 128
    $region69: #{tpu_custom_call.1} parent=1 // pred_fallthru
      _
    // Predicated region
    $region70: #{tpu_custom_call.1} parent=1 // pred_check
      _
    $region71: #{tpu_custom_call.1} parent=1 // pred_check_branch
      %281 = sbr.rel (0) target = $region73
    $region72: #{tpu_custom_call.1} parent=1 // pred_region
      %282 = dma.done [#allocation17], 128
    $region73: #{tpu_custom_call.1} parent=1 // pred_fallthru
      _
    %283 = vsyncpa [#allocation5], 1
    %284 = vsyncpa [#allocation8], 1
    %285 = vsyncpa [#allocation11], 1
    %286 = vsyncpa [#allocation14], 1
    %287 = vsyncpa [#allocation6], 1
    %288 = vsyncpa [#allocation17], 1

</llo_original>
